<compile_context>
chip_gen: v5e
topology: v5e:2x2
jax: 0.10.0
libtpu: 0.0.40
codegen_flags: <defaults>
</compile_context>

<pallas_src>
from collections import namedtuple

import jax
import jax.numpy as jnp
from jax import lax
from jax.experimental import pallas as pl
from jax.experimental.pallas import tpu as pltpu

LossTuple = namedtuple(
    "LossTuple",
    ["rpn_loc_loss", "rpn_cls_loss", "roi_loc_loss", "roi_cls_loss", "total_loss"],
)

RPN_SIGMA = 3.0   # opt.rpn_sigma default
ROI_SIGMA = 1.0   # opt.roi_sigma default
N_CLASS = 21      # 20 foreground classes + background (must stay <= 32 for the
                  # 84->128 lane pad to remain numerically inert, see RoI block)


def _smooth_l1_terms(diff, sigma):
    """Element-wise smooth-L1 terms (same as torch _smooth_l1_loss pre-sum)."""
    sigma2 = sigma * sigma
    abs_diff = jnp.abs(diff)
    flag = (abs_diff < (1.0 / sigma2)).astype(jnp.float32)
    return flag * (sigma2 / 2.0) * diff * diff + (1.0 - flag) * (abs_diff - 0.5 / sigma2)


def _losses_kernel(rpn_loc_ref, gt_rpn_loc_ref, rpn_pos_w_ref, rpn_label_ref,
                   rpn_score_ref, roi_cls_loc_ref, gt_roi_loc_ref,
                   roi_label_col_ref, roi_label_row_ref, roi_score_ref, out_ref):
    f32 = jnp.float32

    # ---- RPN valid-anchor count (shared normalizer, one reciprocal) ----
    rpn_lab = rpn_label_ref[...]                          # (Ap//128, 128) int32
    rpn_valid = (rpn_lab >= 0).astype(f32)                # padding = -1 -> excluded
    # NOTE: matches PyTorch/reference behavior — no guard against zero valid
    # anchors (would be NaN/Inf in the reference too).
    inv_rpn = 1.0 / jnp.sum(rpn_valid)

    # ---- RPN localization loss (_fast_rcnn_loc_loss, sigma = rpn_sigma) ----
    # Fully dense (Ap*4//128, 128) flat layout; weight already expanded x4.
    rpn_diff = rpn_pos_w_ref[...] * (rpn_loc_ref[...].astype(f32)
                                     - gt_rpn_loc_ref[...].astype(f32))
    rpn_loc_loss = jnp.sum(_smooth_l1_terms(rpn_diff, RPN_SIGMA)) * inv_rpn

    # ---- RPN classification loss (2-class CE, ignore_index = -1), elementwise LSE ----
    s0 = rpn_score_ref[0].astype(f32)                     # (Ap//128, 128) dense plane
    s1 = rpn_score_ref[1].astype(f32)                     # (Ap//128, 128) dense plane
    m = jnp.maximum(s0, s1)
    lse = m + jnp.log(1.0 + jnp.exp(-jnp.abs(s0 - s1)))   # (Ap//128, 128)
    picked = jnp.where(rpn_lab == 1, s1, s0)
    rpn_cls_loss = jnp.sum((lse - picked) * rpn_valid) * inv_rpn

    # ---- RoI valid count (true ROI count, one reciprocal) ----
    roi_lab_r = roi_label_row_ref[...]                    # (1, Sp128) int32, pad = -1
    roi_valid = (roi_lab_r >= 0).astype(f32)
    inv_roi = 1.0 / jnp.sum(roi_valid)

    # ---- RoI localization loss: fused class-gather + smooth L1 (single pass) ----
    roi_lab_c = roi_label_col_ref[...]                    # (Sp, 1) int32, pad = -1
    roi_pos = (roi_lab_c > 0).astype(f32)                 # (Sp, 1)
    roi_cls_loc = roi_cls_loc_ref[...].astype(f32)        # (Sp, 128) (84 real lanes)
    gt_tiled = gt_roi_loc_ref[...].astype(f32)            # (Sp, 128)
    col_idx = lax.broadcasted_iota(jnp.int32, roi_cls_loc.shape, 1)
    # cols 84..127 give (col>>2) in [21,31] which never matches a label <= 20,
    # and padded labels are -1, so the lane pad is numerically inert.
    sel = ((col_idx >> 2) == roi_lab_c).astype(f32) * roi_pos
    roi_diff = sel * (roi_cls_loc - gt_tiled)
    roi_loc_loss = jnp.sum(_smooth_l1_terms(roi_diff, ROI_SIGMA)) * inv_roi

    # ---- RoI classification loss (plain CE, mean over true ROI count) ----
    rs = roi_score_ref[...].astype(f32)                   # (N_CLASS, Sp128)
    rm = jnp.max(rs, axis=0, keepdims=True)               # (1, Sp128)
    rlse = rm + jnp.log(jnp.sum(jnp.exp(rs - rm), axis=0, keepdims=True))
    row_idx = lax.broadcasted_iota(jnp.int32, rs.shape, 0)
    picked_r = jnp.sum((row_idx == roi_lab_r).astype(f32) * rs,
                       axis=0, keepdims=True)             # (1, Sp128)
    roi_cls_loss = jnp.sum((rlse - picked_r) * roi_valid) * inv_roi

    total = rpn_loc_loss + rpn_cls_loss + roi_loc_loss + roi_cls_loss

    out_ref[0] = rpn_loc_loss
    out_ref[1] = rpn_cls_loss
    out_ref[2] = roi_loc_loss
    out_ref[3] = roi_cls_loss
    out_ref[4] = total


def _pad_axis(x, axis, multiple, value=0):
    size = x.shape[axis]
    pad = (-size) % multiple
    if pad == 0:
        return x
    widths = [(0, 0)] * x.ndim
    widths[axis] = (0, pad)
    return jnp.pad(x, widths, constant_values=value)


def faster_rcnn_trainer_losses(rpn_loc, gt_rpn_loc, gt_rpn_label, rpn_score,
                               roi_cls_loc, gt_roi_loc, gt_roi_label, roi_score):
    """Wrapper: returns LossTuple of 5 scalar float32 losses.

    Accepts the original (PyTorch) layouts:
      rpn_loc (A,4), gt_rpn_loc (A,4), gt_rpn_label (A,), rpn_score (A,2),
      roi_cls_loc (S,4*N_CLASS), gt_roi_loc (S,4), gt_roi_label (S,),
      roi_score (S,N_CLASS).
    Layout plumbing below is pads + contiguous reshapes + one small transpose
    per score tensor; float inputs keep their dtype across the pallas_call
    boundary (bf16 stays bf16, cast to f32 inside the kernel after DMA).
    """
    A = rpn_loc.shape[0]
    S = roi_score.shape[0]
    Ap = A + ((-A) % 128)       # anchor axis padded to a lane multiple

    # -- RPN loc path: keep (A,4), flat-reshape to fully dense (Ap*4//128, 128).
    pos_w4 = jnp.broadcast_to(
        (gt_rpn_label > 0).astype(jnp.float32)[:, None], (A, 4))
    rpn_loc_flat = _pad_axis(rpn_loc, 0, 128).reshape(Ap * 4 // 128, 128)
    gt_rpn_loc_flat = _pad_axis(gt_rpn_loc, 0, 128).reshape(Ap * 4 // 128, 128)
    rpn_pos_w_flat = _pad_axis(pos_w4, 0, 128).reshape(Ap * 4 // 128, 128)

    # -- RPN cls path: dense label plane + (2, Ap//128, 128) score planes.
    rpn_label_plane = _pad_axis(
        gt_rpn_label.astype(jnp.int32).reshape(1, A), 1, 128, value=-1
    ).reshape(Ap // 128, 128)
    rpn_score_planes = _pad_axis(
        jnp.transpose(rpn_score), 1, 128).reshape(2, Ap // 128, 128)

    # -- RoI path: pad 84 lanes -> 128 for unmasked vector ops.
    roi_cls_loc_p = _pad_axis(_pad_axis(roi_cls_loc, 1, 128), 0, 8)       # (Sp, 128)
    gt_roi_loc_tiled = _pad_axis(
        _pad_axis(jnp.tile(gt_roi_loc, (1, N_CLASS)), 1, 128), 0, 8)      # (Sp, 128)
    roi_label_col = _pad_axis(gt_roi_label.astype(jnp.int32).reshape(S, 1),
                              0, 8, value=-1)                             # (Sp, 1)
    roi_label_row = _pad_axis(gt_roi_label.astype(jnp.int32).reshape(1, S),
                              1, 128, value=-1)                           # (1, Sp128)
    roi_score_t = _pad_axis(jnp.transpose(roi_score), 1, 128)             # (21, Sp128)

    inputs = (
        rpn_loc_flat, gt_rpn_loc_flat, rpn_pos_w_flat, rpn_label_plane,
        rpn_score_planes,
        roi_cls_loc_p, gt_roi_loc_tiled, roi_label_col, roi_label_row,
        roi_score_t,
    )
    num_in = len(inputs)

    out = pl.pallas_call(
        _losses_kernel,
        out_shape=jax.ShapeDtypeStruct((5,), jnp.float32),
        in_specs=[pl.BlockSpec(memory_space=pltpu.MemorySpace.VMEM)] * num_in,
        out_specs=pl.BlockSpec(memory_space=pltpu.MemorySpace.SMEM),
        compiler_params=pltpu.CompilerParams(
            # Let XLA fuse the wrapper-side pad/reshape/transpose producers
            # into the operand DMAs instead of materializing extra HBM HLOs.
            allow_input_fusion=[True] * num_in,
        ),
    )(*inputs)
    return LossTuple(out[0], out[1], out[2], out[3], out[4])


def _ref_losses(rpn_loc, gt_rpn_loc, gt_rpn_label, rpn_score,
                roi_cls_loc, gt_roi_loc, gt_roi_label, roi_score):
    """Pure-JAX reference mirroring the PyTorch math (for verification)."""
    def smooth_l1_sum(x, t, w, sigma):
        sigma2 = sigma ** 2
        diff = w * (x - t)
        ad = jnp.abs(diff)
        flag = (ad < 1.0 / sigma2).astype(jnp.float32)
        return jnp.sum(flag * (sigma2 / 2.0) * diff ** 2 + (1 - flag) * (ad - 0.5 / sigma2))

    S = roi_score.shape[0]

    w_rpn = (gt_rpn_label > 0).astype(jnp.float32)[:, None] * jnp.ones((1, 4), jnp.float32)
    rpn_loc_loss = smooth_l1_sum(rpn_loc, gt_rpn_loc, w_rpn, RPN_SIGMA) / jnp.sum(
        (gt_rpn_label >= 0).astype(jnp.float32))

    logp = jax.nn.log_softmax(rpn_score, axis=-1)
    valid = (gt_rpn_label >= 0)
    lab_safe = jnp.where(valid, gt_rpn_label, 0)
    nll = -jnp.take_along_axis(logp, lab_safe[:, None], axis=-1)[:, 0]
    rpn_cls_loss = jnp.sum(nll * valid.astype(jnp.float32)) / jnp.sum(valid.astype(jnp.float32))

    roi_loc = roi_cls_loc.reshape(S, -1, 4)[jnp.arange(S), gt_roi_label]
    w_roi = (gt_roi_label > 0).astype(jnp.float32)[:, None] * jnp.ones((1, 4), jnp.float32)
    roi_loc_loss = smooth_l1_sum(roi_loc, gt_roi_loc, w_roi, ROI_SIGMA) / jnp.sum(
        (gt_roi_label >= 0).astype(jnp.float32))

    logp_r = jax.nn.log_softmax(roi_score, axis=-1)
    roi_cls_loss = jnp.mean(-jnp.take_along_axis(logp_r, gt_roi_label[:, None], axis=-1)[:, 0])

    total = rpn_loc_loss + rpn_cls_loss + roi_loc_loss + roi_cls_loss
    return jnp.stack([rpn_loc_loss, rpn_cls_loss, roi_loc_loss, roi_cls_loss, total])


if __name__ == "__main__":
    key = jax.random.PRNGKey(0)
    A = 256   # number of RPN anchors (synthetic; real model uses H/16*W/16*9)
    S = 32    # number of sampled RoIs (real model uses 128)

    ks = jax.random.split(key, 8)
    rpn_loc = jax.random.normal(ks[0], (A, 4), jnp.float32)
    gt_rpn_loc = jax.random.normal(ks[1], (A, 4), jnp.float32)
    gt_rpn_label = jax.random.randint(ks[2], (A,), -1, 2)        # {-1, 0, 1}
    gt_rpn_label = gt_rpn_label.at[0].set(1).at[1].set(0)        # ensure valid/pos present
    rpn_score = jax.random.normal(ks[3], (A, 2), jnp.float32)
    roi_cls_loc = jax.random.normal(ks[4], (S, 4 * N_CLASS), jnp.float32)
    gt_roi_loc = jax.random.normal(ks[5], (S, 4), jnp.float32)
    gt_roi_label = jax.random.randint(ks[6], (S,), 0, N_CLASS)   # [0, 20]
    gt_roi_label = gt_roi_label.at[0].set(1)
    roi_score = jax.random.normal(ks[7], (S, N_CLASS), jnp.float32)

    losses = faster_rcnn_trainer_losses(
        rpn_loc, gt_rpn_loc, gt_rpn_label, rpn_score,
        roi_cls_loc, gt_roi_loc, gt_roi_label, roi_score)
    losses = jax.block_until_ready(losses)

    ref = _ref_losses(
        rpn_loc, gt_rpn_loc, gt_rpn_label, rpn_score,
        roi_cls_loc, gt_roi_loc, gt_roi_label, roi_score)
    got = jnp.stack(list(losses))
    assert jnp.allclose(got, ref, rtol=1e-4, atol=1e-4), (got, ref)

    print("KERNEL_OK")
</pallas_src>

<mosaic_0001>
module attributes {stable_mosaic.version = 11 : i64} {
  func.func @_losses_kernel(%arg0: memref<8x128xf32, #tpu.memory_space<vmem>>, %arg1: memref<8x128xf32, #tpu.memory_space<vmem>>, %arg2: memref<8x128xf32, #tpu.memory_space<vmem>>, %arg3: memref<2x128xi32, #tpu.memory_space<vmem>>, %arg4: memref<2x2x128xf32, #tpu.memory_space<vmem>>, %arg5: memref<32x128xf32, #tpu.memory_space<vmem>>, %arg6: memref<32x128xf32, #tpu.memory_space<vmem>>, %arg7: memref<32x1xi32, #tpu.memory_space<vmem>>, %arg8: memref<1x128xi32, #tpu.memory_space<vmem>>, %arg9: memref<21x128xf32, #tpu.memory_space<vmem>>, %arg10: memref<5xf32, #tpu.memory_space<smem>>) attributes {dimension_semantics = [], scalar_prefetch = 0 : i64, scratch_operands = 0 : i64, tpu.core_type = #tpu.core_type<tc>} {
    %c0 = arith.constant 0 : index
    %c0_0 = arith.constant 0 : index
    %0 = vector.load %arg3[%c0, %c0_0] : memref<2x128xi32, #tpu.memory_space<vmem>>, vector<2x128xi32>
    %c0_i32 = arith.constant 0 : i32
    %1 = vector.broadcast %c0_i32 : i32 to vector<2x128xi32>
    %2 = arith.cmpi sge, %0, %1 : vector<2x128xi32>
    %3 = arith.extui %2 : vector<2x128xi1> to vector<2x128xi32>
    %4 = arith.sitofp %3 : vector<2x128xi32> to vector<2x128xf32>
    %5 = vector.shape_cast %4 : vector<2x128xf32> to vector<1x2x128xf32>
    %cst = arith.constant dense<0.000000e+00> : vector<1xf32>
    %6 = vector.multi_reduction <add>, %5, %cst [1, 2] : vector<1x2x128xf32> to vector<1xf32>
    %7 = vector.shape_cast %6 : vector<1xf32> to vector<1x1x1xf32>
    %8 = vector.extract %7[0, 0, 0] : f32 from vector<1x1x1xf32>
    %cst_1 = arith.constant 1.000000e+00 : f32
    %9 = arith.divf %cst_1, %8 : f32
    %c0_2 = arith.constant 0 : index
    %c0_3 = arith.constant 0 : index
    %10 = vector.load %arg2[%c0_2, %c0_3] : memref<8x128xf32, #tpu.memory_space<vmem>>, vector<8x128xf32>
    %c0_4 = arith.constant 0 : index
    %c0_5 = arith.constant 0 : index
    %11 = vector.load %arg0[%c0_4, %c0_5] : memref<8x128xf32, #tpu.memory_space<vmem>>, vector<8x128xf32>
    %c0_6 = arith.constant 0 : index
    %c0_7 = arith.constant 0 : index
    %12 = vector.load %arg1[%c0_6, %c0_7] : memref<8x128xf32, #tpu.memory_space<vmem>>, vector<8x128xf32>
    %13 = arith.subf %11, %12 : vector<8x128xf32>
    %14 = arith.mulf %10, %13 : vector<8x128xf32>
    %15 = math.absf %14 : vector<8x128xf32>
    %cst_8 = arith.constant 0.111111112 : f32
    %16 = vector.broadcast %cst_8 : f32 to vector<8x128xf32>
    %17 = arith.cmpf olt, %15, %16 : vector<8x128xf32>
    %18 = arith.extui %17 : vector<8x128xi1> to vector<8x128xi32>
    %19 = arith.sitofp %18 : vector<8x128xi32> to vector<8x128xf32>
    %cst_9 = arith.constant 4.500000e+00 : f32
    %20 = vector.broadcast %cst_9 : f32 to vector<8x128xf32>
    %21 = arith.mulf %19, %20 : vector<8x128xf32>
    %22 = arith.mulf %21, %14 : vector<8x128xf32>
    %23 = arith.mulf %22, %14 : vector<8x128xf32>
    %cst_10 = arith.constant 1.000000e+00 : f32
    %24 = vector.broadcast %cst_10 : f32 to vector<8x128xf32>
    %25 = arith.subf %24, %19 : vector<8x128xf32>
    %cst_11 = arith.constant 0.055555556 : f32
    %26 = vector.broadcast %cst_11 : f32 to vector<8x128xf32>
    %27 = arith.subf %15, %26 : vector<8x128xf32>
    %28 = arith.mulf %25, %27 : vector<8x128xf32>
    %29 = arith.addf %23, %28 : vector<8x128xf32>
    %30 = vector.shape_cast %29 : vector<8x128xf32> to vector<1x8x128xf32>
    %cst_12 = arith.constant dense<0.000000e+00> : vector<1xf32>
    %31 = vector.multi_reduction <add>, %30, %cst_12 [1, 2] : vector<1x8x128xf32> to vector<1xf32>
    %32 = vector.shape_cast %31 : vector<1xf32> to vector<1x1x1xf32>
    %33 = vector.extract %32[0, 0, 0] : f32 from vector<1x1x1xf32>
    %34 = arith.mulf %33, %9 : f32
    %c0_13 = arith.constant 0 : index
    %c0_14 = arith.constant 0 : index
    %c0_15 = arith.constant 0 : index
    %35 = vector.load %arg4[%c0_13, %c0_14, %c0_15] : memref<2x2x128xf32, #tpu.memory_space<vmem>>, vector<1x2x128xf32>
    %36 = vector.shape_cast %35 : vector<1x2x128xf32> to vector<2x128xf32>
    %c1 = arith.constant 1 : index
    %c0_16 = arith.constant 0 : index
    %c0_17 = arith.constant 0 : index
    %37 = vector.load %arg4[%c1, %c0_16, %c0_17] : memref<2x2x128xf32, #tpu.memory_space<vmem>>, vector<1x2x128xf32>
    %38 = vector.shape_cast %37 : vector<1x2x128xf32> to vector<2x128xf32>
    %39 = arith.maximumf %36, %38 : vector<2x128xf32>
    %40 = arith.subf %36, %38 : vector<2x128xf32>
    %41 = math.absf %40 : vector<2x128xf32>
    %cst_18 = arith.constant 0.000000e+00 : f32
    %42 = vector.broadcast %cst_18 : f32 to vector<2x128xf32>
    %43 = arith.subf %42, %41 : vector<2x128xf32>
    %44 = math.exp %43 : vector<2x128xf32>
    %cst_19 = arith.constant 1.000000e+00 : f32
    %45 = vector.broadcast %cst_19 : f32 to vector<2x128xf32>
    %46 = arith.addf %45, %44 : vector<2x128xf32>
    %47 = math.log %46 : vector<2x128xf32>
    %48 = arith.addf %39, %47 : vector<2x128xf32>
    %c1_i32 = arith.constant 1 : i32
    %49 = vector.broadcast %c1_i32 : i32 to vector<2x128xi32>
    %50 = arith.cmpi eq, %0, %49 : vector<2x128xi32>
    %51 = arith.select %50, %38, %36 : vector<2x128xi1>, vector<2x128xf32>
    %52 = arith.subf %48, %51 : vector<2x128xf32>
    %53 = arith.mulf %52, %4 : vector<2x128xf32>
    %54 = vector.shape_cast %53 : vector<2x128xf32> to vector<1x2x128xf32>
    %cst_20 = arith.constant dense<0.000000e+00> : vector<1xf32>
    %55 = vector.multi_reduction <add>, %54, %cst_20 [1, 2] : vector<1x2x128xf32> to vector<1xf32>
    %56 = vector.shape_cast %55 : vector<1xf32> to vector<1x1x1xf32>
    %57 = vector.extract %56[0, 0, 0] : f32 from vector<1x1x1xf32>
    %58 = arith.mulf %57, %9 : f32
    %c0_21 = arith.constant 0 : index
    %c0_22 = arith.constant 0 : index
    %59 = vector.load %arg8[%c0_21, %c0_22] : memref<1x128xi32, #tpu.memory_space<vmem>>, vector<1x128xi32>
    %c0_i32_23 = arith.constant 0 : i32
    %60 = vector.broadcast %c0_i32_23 : i32 to vector<1x128xi32>
    %61 = arith.cmpi sge, %59, %60 : vector<1x128xi32>
    %62 = arith.extui %61 : vector<1x128xi1> to vector<1x128xi32>
    %63 = arith.sitofp %62 : vector<1x128xi32> to vector<1x128xf32>
    %64 = vector.shape_cast %63 : vector<1x128xf32> to vector<1x1x128xf32>
    %cst_24 = arith.constant dense<0.000000e+00> : vector<1xf32>
    %65 = vector.multi_reduction <add>, %64, %cst_24 [1, 2] : vector<1x1x128xf32> to vector<1xf32>
    %66 = vector.shape_cast %65 : vector<1xf32> to vector<1x1x1xf32>
    %67 = vector.extract %66[0, 0, 0] : f32 from vector<1x1x1xf32>
    %cst_25 = arith.constant 1.000000e+00 : f32
    %68 = arith.divf %cst_25, %67 : f32
    %c0_26 = arith.constant 0 : index
    %c0_27 = arith.constant 0 : index
    %69 = vector.load %arg7[%c0_26, %c0_27] : memref<32x1xi32, #tpu.memory_space<vmem>>, vector<32x1xi32>
    %c0_i32_28 = arith.constant 0 : i32
    %70 = vector.broadcast %c0_i32_28 : i32 to vector<32x1xi32>
    %71 = arith.cmpi sgt, %69, %70 : vector<32x1xi32>
    %72 = arith.extui %71 : vector<32x1xi1> to vector<32x1xi32>
    %73 = arith.sitofp %72 : vector<32x1xi32> to vector<32x1xf32>
    %c0_29 = arith.constant 0 : index
    %c0_30 = arith.constant 0 : index
    %74 = vector.load %arg5[%c0_29, %c0_30] : memref<32x128xf32, #tpu.memory_space<vmem>>, vector<32x128xf32>
    %c0_31 = arith.constant 0 : index
    %c0_32 = arith.constant 0 : index
    %75 = vector.load %arg6[%c0_31, %c0_32] : memref<32x128xf32, #tpu.memory_space<vmem>>, vector<32x128xf32>
    %76 = tpu.iota {dimensions = array<i32: 1>} : vector<32x128xi32>
    %c2_i32 = arith.constant 2 : i32
    %77 = vector.broadcast %c2_i32 : i32 to vector<32x128xi32>
    %78 = arith.shrsi %76, %77 : vector<32x128xi32>
    %79 = vector.broadcast %69 : vector<32x1xi32> to vector<32x128xi32>
    %80 = arith.cmpi eq, %78, %79 : vector<32x128xi32>
    %81 = arith.extui %80 : vector<32x128xi1> to vector<32x128xi32>
    %82 = arith.sitofp %81 : vector<32x128xi32> to vector<32x128xf32>
    %83 = vector.broadcast %73 : vector<32x1xf32> to vector<32x128xf32>
    %84 = arith.mulf %82, %83 : vector<32x128xf32>
    %85 = arith.subf %74, %75 : vector<32x128xf32>
    %86 = arith.mulf %84, %85 : vector<32x128xf32>
    %87 = math.absf %86 : vector<32x128xf32>
    %cst_33 = arith.constant 1.000000e+00 : f32
    %88 = vector.broadcast %cst_33 : f32 to vector<32x128xf32>
    %89 = arith.cmpf olt, %87, %88 : vector<32x128xf32>
    %90 = arith.extui %89 : vector<32x128xi1> to vector<32x128xi32>
    %91 = arith.sitofp %90 : vector<32x128xi32> to vector<32x128xf32>
    %cst_34 = arith.constant 5.000000e-01 : f32
    %92 = vector.broadcast %cst_34 : f32 to vector<32x128xf32>
    %93 = arith.mulf %91, %92 : vector<32x128xf32>
    %94 = arith.mulf %93, %86 : vector<32x128xf32>
    %95 = arith.mulf %94, %86 : vector<32x128xf32>
    %cst_35 = arith.constant 1.000000e+00 : f32
    %96 = vector.broadcast %cst_35 : f32 to vector<32x128xf32>
    %97 = arith.subf %96, %91 : vector<32x128xf32>
    %cst_36 = arith.constant 5.000000e-01 : f32
    %98 = vector.broadcast %cst_36 : f32 to vector<32x128xf32>
    %99 = arith.subf %87, %98 : vector<32x128xf32>
    %100 = arith.mulf %97, %99 : vector<32x128xf32>
    %101 = arith.addf %95, %100 : vector<32x128xf32>
    %102 = vector.shape_cast %101 : vector<32x128xf32> to vector<1x32x128xf32>
    %cst_37 = arith.constant dense<0.000000e+00> : vector<1xf32>
    %103 = vector.multi_reduction <add>, %102, %cst_37 [1, 2] : vector<1x32x128xf32> to vector<1xf32>
    %104 = vector.shape_cast %103 : vector<1xf32> to vector<1x1x1xf32>
    %105 = vector.extract %104[0, 0, 0] : f32 from vector<1x1x1xf32>
    %106 = arith.mulf %105, %68 : f32
    %c0_38 = arith.constant 0 : index
    %c0_39 = arith.constant 0 : index
    %107 = vector.load %arg9[%c0_38, %c0_39] : memref<21x128xf32, #tpu.memory_space<vmem>>, vector<21x128xf32>
    %cst_40 = arith.constant dense<0xFF800000> : vector<128xf32>
    %108 = vector.multi_reduction <maximumf>, %107, %cst_40 [0] : vector<21x128xf32> to vector<128xf32>
    %109 = vector.shape_cast %108 : vector<128xf32> to vector<1x128xf32>
    %110 = vector.broadcast %109 : vector<1x128xf32> to vector<21x128xf32>
    %111 = arith.subf %107, %110 : vector<21x128xf32>
    %112 = math.exp %111 : vector<21x128xf32>
    %cst_41 = arith.constant dense<0.000000e+00> : vector<128xf32>
    %113 = vector.multi_reduction <add>, %112, %cst_41 [0] : vector<21x128xf32> to vector<128xf32>
    %114 = vector.shape_cast %113 : vector<128xf32> to vector<1x128xf32>
    %115 = math.log %114 : vector<1x128xf32>
    %116 = arith.addf %109, %115 : vector<1x128xf32>
    %117 = tpu.iota {dimensions = array<i32: 0>} : vector<21x128xi32>
    %118 = vector.broadcast %59 : vector<1x128xi32> to vector<21x128xi32>
    %119 = arith.cmpi eq, %117, %118 : vector<21x128xi32>
    %120 = arith.extui %119 : vector<21x128xi1> to vector<21x128xi32>
    %121 = arith.sitofp %120 : vector<21x128xi32> to vector<21x128xf32>
    %122 = arith.mulf %121, %107 : vector<21x128xf32>
    %cst_42 = arith.constant dense<0.000000e+00> : vector<128xf32>
    %123 = vector.multi_reduction <add>, %122, %cst_42 [0] : vector<21x128xf32> to vector<128xf32>
    %124 = vector.shape_cast %123 : vector<128xf32> to vector<1x128xf32>
    %125 = arith.subf %116, %124 : vector<1x128xf32>
    %126 = arith.mulf %125, %63 : vector<1x128xf32>
    %127 = vector.shape_cast %126 : vector<1x128xf32> to vector<1x1x128xf32>
    %cst_43 = arith.constant dense<0.000000e+00> : vector<1xf32>
    %128 = vector.multi_reduction <add>, %127, %cst_43 [1, 2] : vector<1x1x128xf32> to vector<1xf32>
    %129 = vector.shape_cast %128 : vector<1xf32> to vector<1x1x1xf32>
    %130 = vector.extract %129[0, 0, 0] : f32 from vector<1x1x1xf32>
    %131 = arith.mulf %130, %68 : f32
    %132 = arith.addf %34, %58 : f32
    %133 = arith.addf %132, %106 : f32
    %134 = arith.addf %133, %131 : f32
    %c0_44 = arith.constant 0 : index
    %135 = memref.load %arg10[%c0_44] : memref<5xf32, #tpu.memory_space<smem>>
    memref.store %34, %arg10[%c0_44] : memref<5xf32, #tpu.memory_space<smem>>
    %c1_45 = arith.constant 1 : index
    %136 = memref.load %arg10[%c1_45] : memref<5xf32, #tpu.memory_space<smem>>
    memref.store %58, %arg10[%c1_45] : memref<5xf32, #tpu.memory_space<smem>>
    %c2 = arith.constant 2 : index
    %137 = memref.load %arg10[%c2] : memref<5xf32, #tpu.memory_space<smem>>
    memref.store %106, %arg10[%c2] : memref<5xf32, #tpu.memory_space<smem>>
    %c3 = arith.constant 3 : index
    %138 = memref.load %arg10[%c3] : memref<5xf32, #tpu.memory_space<smem>>
    memref.store %131, %arg10[%c3] : memref<5xf32, #tpu.memory_space<smem>>
    %c4 = arith.constant 4 : index
    %139 = memref.load %arg10[%c4] : memref<5xf32, #tpu.memory_space<smem>>
    memref.store %134, %arg10[%c4] : memref<5xf32, #tpu.memory_space<smem>>
    return
  }
}

</mosaic_0001>

<llo_original>
// kernel: tpu_custom_call.1
$region0: #{tpu_custom_call.1}
  #allocation0 [shape = 'u32[]', space=smem, size = 0x4, offset = 0x4, fixed_abs, tag = 'smem constant byte address 0x4 - core index']
  #allocation1 [shape = 'u32[72,128]{1,0:T(1,128)}', space=vmem, size = 0x9000, scoped, tag = 'internal scratch']
  %s0 = inlined_call_operand.hbm [shape: f32[8,128], index: 0, kind: input, shape index: {}]
  %s1 = inlined_call_operand.hbm [shape: f32[8,128], index: 1, kind: input, shape index: {}]
  %s2 = inlined_call_operand.hbm [shape: f32[8,128], index: 2, kind: input, shape index: {}]
  %s3 = inlined_call_operand.hbm [shape: s32[2,128], index: 3, kind: input, shape index: {}]
  %s4 = inlined_call_operand.hbm [shape: f32[2,2,128], index: 4, kind: input, shape index: {}]
  %s5 = inlined_call_operand.vmem [shape: f32[32,128], index: 5, kind: input, shape index: {}]
  %s6 = inlined_call_operand.hbm [shape: f32[32,128], index: 6, kind: input, shape index: {}]
  %s7 = inlined_call_operand.vmem [shape: s32[32,1], index: 7, kind: input, shape index: {}]
  %s8 = inlined_call_operand.vmem [shape: s32[1,128], index: 8, kind: input, shape index: {}]
  %s9 = inlined_call_operand.hbm [shape: f32[21,128], index: 9, kind: input, shape index: {}]
  %s10 = inlined_call_operand.hbm [shape: f32[5], index: 10, kind: output, shape index: {}]
  %s11 = sld [smem:[#allocation0]]
  $region78: #{tpu_custom_call.1} parent=0
    _
  %s13 = ssub.s32 1, %s11
  %s14 = scalar_select 0, %s13, %s11
  $region1: #{tpu_custom_call.1} parent=0
    #allocation2 [shape = 'u8[4096]{0}', space=vmem, size = 0x1000, scoped, tag = 'input window, operand 0, single buffered']
    #allocation3 [shape = 's32[1]{0}', space=sflag, size = 0x4, scoped, tag = 'scoped memory for tpu_custom_call.1']
    #allocation4 [shape = 's32[1]{0}', space=sflag, size = 0x4, scoped, tag = 'scoped memory for tpu_custom_call.1']
    #allocation5 [shape = 'u8[4096]{0}', space=vmem, size = 0x1000, scoped, tag = 'input window, operand 1, single buffered']
    #allocation6 [shape = 's32[1]{0}', space=sflag, size = 0x4, scoped, tag = 'scoped memory for tpu_custom_call.1']
    #allocation7 [shape = 'u8[4096]{0}', space=vmem, size = 0x1000, scoped, tag = 'input window, operand 2, single buffered']
    #allocation8 [shape = 'u8[1024]{0}', space=vmem, size = 0x400, scoped, tag = 'input window, operand 3, single buffered']
    #allocation9 [shape = 's32[1]{0}', space=sflag, size = 0x4, scoped, tag = 'scoped memory for tpu_custom_call.1']
    #allocation10 [shape = 'u8[2048]{0}', space=vmem, size = 0x800, scoped, tag = 'input window, operand 4, single buffered']
    #allocation11 [shape = 'u8[16384]{0}', space=vmem, size = 0x4000, scoped, tag = 'input window, operand 6, single buffered']
    #allocation12 [shape = 's32[1]{0}', space=sflag, size = 0x4, scoped, tag = 'scoped memory for tpu_custom_call.1']
    #allocation13 [shape = 'u8[12288]{0}', space=vmem, size = 0x3000, scoped, tag = 'input window, operand 9, single buffered']
    #allocation14 [shape = 'u8[512]{0}', space=smem, size = 0x200, scoped, tag = 'output window, operand 0, single buffered']
    %15 = vsyncpa [#allocation3], 0
    %16 = vsyncpa [#allocation6], 0
    %17 = vsyncpa [#allocation9], 0
    %18 = vsyncpa [#allocation12], 0
    %19 = vsyncpa [#allocation4], 0
    // Predicated region
    $region2: #{tpu_custom_call.1} parent=1 // pred_check
      _
    $region3: #{tpu_custom_call.1} parent=1 // pred_check_branch
      %21 = sbr.rel (0) target = $region5
    $region4: #{tpu_custom_call.1} parent=1 // pred_region
      %23 = vsyncadd [#allocation3], 0
      %s25 = sshll.u32 %s0, 4
      %s26 = int_to_ptr.hbm [resolvable:$true] %s25
      %s27 = sshll.u32 [#allocation2], 4
      %s28 = int_to_ptr.vmem [resolvable:$true] %s27
      %30 = dma.hbm_to_vmem [thread:$0]  %s26, 128, %s28, [#allocation3]
    $region5: #{tpu_custom_call.1} parent=1 // pred_fallthru
      _
    // Predicated region
    $region6: #{tpu_custom_call.1} parent=1 // pred_check
      _
    $region7: #{tpu_custom_call.1} parent=1 // pred_check_branch
      %32 = sbr.rel (0) target = $region9
    $region8: #{tpu_custom_call.1} parent=1 // pred_region
      %34 = vsyncadd [#allocation6], 0
      %s36 = sshll.u32 %s1, 4
      %s37 = int_to_ptr.hbm [resolvable:$true] %s36
      %s38 = sshll.u32 [#allocation5], 4
      %s39 = int_to_ptr.vmem [resolvable:$true] %s38
      %41 = dma.hbm_to_vmem [thread:$0]  %s37, 128, %s39, [#allocation6]
    $region9: #{tpu_custom_call.1} parent=1 // pred_fallthru
      _
    // Predicated region
    $region10: #{tpu_custom_call.1} parent=1 // pred_check
      _
    $region11: #{tpu_custom_call.1} parent=1 // pred_check_branch
      %43 = sbr.rel (0) target = $region13
    $region12: #{tpu_custom_call.1} parent=1 // pred_region
      %45 = vsyncadd [#allocation6], 0
      %s47 = sshll.u32 %s2, 4
      %s48 = int_to_ptr.hbm [resolvable:$true] %s47
      %s49 = sshll.u32 [#allocation7], 4
      %s50 = int_to_ptr.vmem [resolvable:$true] %s49
      %52 = dma.hbm_to_vmem [thread:$0]  %s48, 128, %s50, [#allocation6]
    $region13: #{tpu_custom_call.1} parent=1 // pred_fallthru
      _
    // Predicated region
    $region14: #{tpu_custom_call.1} parent=1 // pred_check
      _
    $region15: #{tpu_custom_call.1} parent=1 // pred_check_branch
      %54 = sbr.rel (0) target = $region17
    $region16: #{tpu_custom_call.1} parent=1 // pred_region
      %56 = vsyncadd [#allocation9], 0
      %s58 = sshll.u32 %s3, 4
      %s59 = int_to_ptr.hbm [resolvable:$true] %s58
      %s60 = sshll.u32 [#allocation8], 4
      %s61 = int_to_ptr.vmem [resolvable:$true] %s60
      %63 = dma.hbm_to_vmem [thread:$0]  %s59, 32, %s61, [#allocation9]
    $region17: #{tpu_custom_call.1} parent=1 // pred_fallthru
      _
    // Predicated region
    $region18: #{tpu_custom_call.1} parent=1 // pred_check
      _
    $region19: #{tpu_custom_call.1} parent=1 // pred_check_branch
      %65 = sbr.rel (0) target = $region21
    $region20: #{tpu_custom_call.1} parent=1 // pred_region
      %67 = vsyncadd [#allocation9], 0
      %s68 = sshll.u32 %s4, 4
      %s69 = int_to_ptr.hbm [resolvable:$true] %s68
      %s70 = sshll.u32 [#allocation10], 4
      %s71 = int_to_ptr.vmem [resolvable:$true] %s70
      %76 = dma.hbm_to_vmem [thread:$0]  %s69, 64, %s71, [#allocation9], 32, 32, 2
    $region21: #{tpu_custom_call.1} parent=1 // pred_fallthru
      _
    // Predicated region
    $region22: #{tpu_custom_call.1} parent=1 // pred_check
      _
    $region23: #{tpu_custom_call.1} parent=1 // pred_check_branch
      %78 = sbr.rel (0) target = $region25
    $region24: #{tpu_custom_call.1} parent=1 // pred_region
      _
    $region25: #{tpu_custom_call.1} parent=1 // pred_fallthru
      _
    // Predicated region
    $region26: #{tpu_custom_call.1} parent=1 // pred_check
      _
    $region27: #{tpu_custom_call.1} parent=1 // pred_check_branch
      %80 = sbr.rel (0) target = $region29
    $region28: #{tpu_custom_call.1} parent=1 // pred_region
      %82 = vsyncadd [#allocation12], 0
      %s83 = sshll.u32 %s6, 4
      %s84 = int_to_ptr.hbm [resolvable:$true] %s83
      %s85 = sshll.u32 [#allocation11], 4
      %s86 = int_to_ptr.vmem [resolvable:$true] %s85
      %91 = dma.hbm_to_vmem [thread:$0]  %s84, 512, %s86, [#allocation12], 128, 128, 8
    $region29: #{tpu_custom_call.1} parent=1 // pred_fallthru
      _
    // Predicated region
    $region30: #{tpu_custom_call.1} parent=1 // pred_check
      _
    $region31: #{tpu_custom_call.1} parent=1 // pred_check_branch
      %93 = sbr.rel (0) target = $region33
    $region32: #{tpu_custom_call.1} parent=1 // pred_region
      _
    $region33: #{tpu_custom_call.1} parent=1 // pred_fallthru
      _
    // Predicated region
    $region34: #{tpu_custom_call.1} parent=1 // pred_check
      _
    $region35: #{tpu_custom_call.1} parent=1 // pred_check_branch
      %95 = sbr.rel (0) target = $region37
    $region36: #{tpu_custom_call.1} parent=1 // pred_region
      _
    $region37: #{tpu_custom_call.1} parent=1 // pred_fallthru
      _
    // Predicated region
    $region38: #{tpu_custom_call.1} parent=1 // pred_check
      _
    $region39: #{tpu_custom_call.1} parent=1 // pred_check_branch
      %97 = sbr.rel (0) target = $region41
    $region40: #{tpu_custom_call.1} parent=1 // pred_region
      %99 = vsyncadd [#allocation12], 0
      %s100 = sshll.u32 %s9, 4
      %s101 = int_to_ptr.hbm [resolvable:$true] %s100
      %s102 = sshll.u32 [#allocation13], 4
      %s103 = int_to_ptr.vmem [resolvable:$true] %s102
      %108 = dma.hbm_to_vmem [thread:$0]  %s101, 384, %s103, [#allocation12], 128, 128, 8
    $region41: #{tpu_custom_call.1} parent=1 // pred_fallthru
      _
    // Predicated region
    $region42: #{tpu_custom_call.1} parent=1 // pred_check
      _
    $region43: #{tpu_custom_call.1} parent=1 // pred_check_branch
      %110 = sbr.rel (0) target = $region45
    $region44: #{tpu_custom_call.1} parent=1 // pred_region
      %112 = dma.done [#allocation3], 128
    $region45: #{tpu_custom_call.1} parent=1 // pred_fallthru
      _
    // Predicated region
    $region46: #{tpu_custom_call.1} parent=1 // pred_check
      _
    $region47: #{tpu_custom_call.1} parent=1 // pred_check_branch
      %114 = sbr.rel (0) target = $region49
    $region48: #{tpu_custom_call.1} parent=1 // pred_region
      %116 = dma.done [#allocation6], 128
    $region49: #{tpu_custom_call.1} parent=1 // pred_fallthru
      _
    // Predicated region
    $region50: #{tpu_custom_call.1} parent=1 // pred_check
      _
    $region51: #{tpu_custom_call.1} parent=1 // pred_check_branch
      %118 = sbr.rel (0) target = $region53
    $region52: #{tpu_custom_call.1} parent=1 // pred_region
      %120 = dma.done [#allocation6], 128
    $region53: #{tpu_custom_call.1} parent=1 // pred_fallthru
      _
    // Predicated region
    $region54: #{tpu_custom_call.1} parent=1 // pred_check
      _
    $region55: #{tpu_custom_call.1} parent=1 // pred_check_branch
      %122 = sbr.rel (0) target = $region57
    $region56: #{tpu_custom_call.1} parent=1 // pred_region
      %124 = dma.done [#allocation9], 32
    $region57: #{tpu_custom_call.1} parent=1 // pred_fallthru
      _
    // Predicated region
    $region58: #{tpu_custom_call.1} parent=1 // pred_check
      _
    $region59: #{tpu_custom_call.1} parent=1 // pred_check_branch
      %126 = sbr.rel (0) target = $region61
    $region60: #{tpu_custom_call.1} parent=1 // pred_region
      %128 = dma.done [#allocation9], 64
    $region61: #{tpu_custom_call.1} parent=1 // pred_fallthru
      _
    // Predicated region
    $region62: #{tpu_custom_call.1} parent=1 // pred_check
      _
    $region63: #{tpu_custom_call.1} parent=1 // pred_check_branch
      %130 = sbr.rel (0) target = $region65
    $region64: #{tpu_custom_call.1} parent=1 // pred_region
      %132 = dma.done [#allocation12], 512
    $region65: #{tpu_custom_call.1} parent=1 // pred_fallthru
      _
    // Predicated region
    $region66: #{tpu_custom_call.1} parent=1 // pred_check
      _
    $region67: #{tpu_custom_call.1} parent=1 // pred_check_branch
      %134 = sbr.rel (0) target = $region69
    $region68: #{tpu_custom_call.1} parent=1 // pred_region
      %136 = dma.done [#allocation12], 384
    $region69: #{tpu_custom_call.1} parent=1 // pred_fallthru
      _
    %v137 = vld [vmem:[#allocation8] sm:$0x3]
    %vm138 = vcmp.ge.s32.totalorder %v137, 0
    %v139 = vsel %vm138, 1, 0
    %v140 = vcvt.s32.f32 %v139
    %vm141 = vcmask 1041408
    %v142 = vsel %vm141, %v140, 0.0
    %143 = vadd.xlane.f32.xlu0 %v142
    %v144 = vpop.xlane.xlu0 %143
    %v145 = vrot.slane %v144, 4
    %v146 = vadd.f32 %v144, %v145
    %v147 = vrot.slane %v146, 2
    %v148 = vadd.f32 %v146, %v147
    %v149 = vrot.slane %v148, 1
    %v150 = vadd.f32 %v148, %v149
    %s151 = vtos %v150
    %v152 = vstv %s151
    %v153 = vrcp.pop %v152
    %v154 = vmul.f32 %v152, %v153
    %v155 = vsub.f32 1.0, %v154
    %v156 = vmul.f32 %v153, %v155
    %v157 = vadd.f32 %v153, %v156
    %vm158 = vweird.f32 %v152
    %vm159 = vweird.f32 %v153
    %vm160 = vmor %vm158, %vm159
    %v161 = vsel %vm160, %v153, %v157
    %v162 = vand.u32 2147483647, %v152
    %vm163 = vcmp.eq.f32.partialorder %v162, 8.507059e+37
    %v164 = vand.u32 %v152, 2147483648
    %v165 = vor.u32 1.1754944e-38, %v164
    %v166 = vsel %vm163, %v165, %v161
    %s167 = vtos %v166
    %v168 = vld [vmem:[#allocation7] sm:$0xff]
    %v169 = vld [vmem:[#allocation2] sm:$0xff]
    %v170 = vld [vmem:[#allocation5] sm:$0xff]
    %v171 = vsub.f32 %v169, %v170
    %v172 = vmul.f32 %v168, %v171
    %v173 = vand.u32 2147483647, %v172
    %vm174 = vcmp.lt.f32.partialorder %v173, 0.11111111
    %v175 = vsel %vm174, 1, 0
    %v176 = vcvt.s32.f32 %v175
    %v177 = vmul.f32 %v176, 4.5
    %v178 = vmul.f32 %v177, %v172
    %v179 = vmul.f32 %v178, %v172
    %v180 = vsub.f32 1.0, %v176
    %v181 = vsub.f32 %v173, 0.055555556
    %v182 = vmul.f32 %v180, %v181
    %v183 = vadd.f32 %v179, %v182
    %184 = vadd.xlane.f32.xlu0 %v183
    %v185 = vpop.xlane.xlu0 %184
    %v186 = vrot.slane %v185, 4
    %v187 = vadd.f32 %v185, %v186
    %v188 = vrot.slane %v187, 2
    %v189 = vadd.f32 %v187, %v188
    %v190 = vrot.slane %v189, 1
    %v191 = vadd.f32 %v189, %v190
    %s192 = vtos %v191
    %s193 = smul.f32 %s192, %s167
    %v194 = vld [vmem:[#allocation10] sm:$0x3]
    %s195 = scalar_lea.vmem [#allocation10], 2
    %v196 = vld [vmem:[%s195] sm:$0x3]
    %v197 = vmax.f32 %v194, %v196
    %v198 = vsub.f32 %v194, %v196
    %v199 = vand.u32 2147483647, %v198
    %v200 = vsub.f32 0.0, %v199
    %v201 = vmul.f32 %v200, 1.442695
    %v202 = vpow.pop %v201
    %v203 = vadd.f32 %v202, 1.0
    %v204 = vlog2.pop %v203
    %v205 = vmul.f32 %v204, 0.6931472
    %v206 = vadd.f32 %v197, %v205
    %vm207 = vcmp.eq.s32.totalorder %v137, 1
    %v208 = vsel %vm207, %v196, %v194
    %v209 = vsub.f32 %v206, %v208
    %v210 = vmul.f32 %v209, %v140
    %v211 = vsel %vm141, %v210, 0.0
    %212 = vadd.xlane.f32.xlu0 %v211
    %v213 = vpop.xlane.xlu0 %212
    %v214 = vrot.slane %v213, 4
    %v215 = vadd.f32 %v213, %v214
    %v216 = vrot.slane %v215, 2
    %v217 = vadd.f32 %v215, %v216
    %v218 = vrot.slane %v217, 1
    %v219 = vadd.f32 %v217, %v218
    %s220 = vtos %v219
    %s221 = smul.f32 %s220, %s167
    %v222 = vld [vmem:[%s8] sm:$0x1]
    %vm223 = vcmp.ge.s32.totalorder %v222, 0
    %v224 = vsel %vm223, 1, 0
    %v225 = vcvt.s32.f32 %v224
    %vm226 = vcmask 1040384
    %v227 = vsel %vm226, %v225, 0.0
    %228 = vadd.xlane.f32.xlu0 %v227
    %v229 = vpop.xlane.xlu0 %228
    %v230 = vrot.slane %v229, 4
    %v231 = vadd.f32 %v229, %v230
    %v232 = vrot.slane %v231, 2
    %v233 = vadd.f32 %v231, %v232
    %v234 = vrot.slane %v233, 1
    %v235 = vadd.f32 %v233, %v234
    %s236 = vtos %v235
    %v237 = vstv %s236
    %v238 = vrcp.pop %v237
    %v239 = vmul.f32 %v237, %v238
    %v240 = vsub.f32 1.0, %v239
    %v241 = vmul.f32 %v238, %v240
    %v242 = vadd.f32 %v238, %v241
    %vm243 = vweird.f32 %v237
    %vm244 = vweird.f32 %v238
    %vm245 = vmor %vm243, %vm244
    %v246 = vsel %vm245, %v238, %v242
    %v247 = vand.u32 2147483647, %v237
    %vm248 = vcmp.eq.f32.partialorder %v247, 8.507059e+37
    %v249 = vand.u32 %v237, 2147483648
    %v250 = vor.u32 1.1754944e-38, %v249
    %v251 = vsel %vm248, %v250, %v246
    %s252 = vtos %v251
    %v253 = vld [vmem:[%s7] sm:$0xff]
    %v254 = vld [vmem:[%s7 + $0x8] sm:$0xff]
    %v255 = vld [vmem:[%s7 + $0x10] sm:$0xff]
    %v256 = vld [vmem:[%s7 + $0x18] sm:$0xff]
    %vm257 = vcmp.gt.s32.totalorder %v253, 0
    %vm258 = vcmp.gt.s32.totalorder %v254, 0
    %vm259 = vcmp.gt.s32.totalorder %v255, 0
    %vm260 = vcmp.gt.s32.totalorder %v256, 0
    %v261 = vsel %vm257, 1, 0
    %v262 = vsel %vm258, 1, 0
    %v263 = vsel %vm259, 1, 0
    %v264 = vsel %vm260, 1, 0
    %v265 = vcvt.s32.f32 %v261
    %v266 = vcvt.s32.f32 %v262
    %v267 = vcvt.s32.f32 %v263
    %v268 = vcvt.s32.f32 %v264
    %v269 = vld [vmem:[%s5] sm:$0xff]
    %v270 = vld [vmem:[%s5 + $0x8] sm:$0xff]
    %v271 = vld [vmem:[%s5 + $0x10] sm:$0xff]
    %v272 = vld [vmem:[%s5 + $0x18] sm:$0xff]
    %v273 = vld [vmem:[#allocation11] sm:$0xff]
    %v274 = vld [vmem:[#allocation11 + $0x8] sm:$0xff]
    %v275 = vld [vmem:[#allocation11 + $0x10] sm:$0xff]
    %v276 = vld [vmem:[#allocation11 + $0x18] sm:$0xff]
    %v277 = vlaneseq
    %v278 = vand.u32 %v277, 127
    %v279 = vshra.s32 %v278, 2
    %280 = vset.pattern.permute.xlu0 0
    %281 = vperm.xlu0 %280, %v253
    %v282 = vpop.permute.xlu0 %281
    %283 = vset.pattern.permute.xlu0 0
    %284 = vperm.xlu0 %283, %v254
    %v285 = vpop.permute.xlu0 %284
    %286 = vset.pattern.permute.xlu0 0
    %287 = vperm.xlu0 %286, %v255
    %v288 = vpop.permute.xlu0 %287
    %289 = vset.pattern.permute.xlu0 0
    %290 = vperm.xlu0 %289, %v256
    %v291 = vpop.permute.xlu0 %290
    %vm292 = vcmp.eq.s32.totalorder %v279, %v282
    %vm293 = vcmp.eq.s32.totalorder %v279, %v285
    %vm294 = vcmp.eq.s32.totalorder %v279, %v288
    %vm295 = vcmp.eq.s32.totalorder %v279, %v291
    %v296 = vsel %vm292, 1, 0
    %v297 = vsel %vm293, 1, 0
    %v298 = vsel %vm294, 1, 0
    %v299 = vsel %vm295, 1, 0
    %v300 = vcvt.s32.f32 %v296
    %v301 = vcvt.s32.f32 %v297
    %v302 = vcvt.s32.f32 %v298
    %v303 = vcvt.s32.f32 %v299
    %305 = vset.pattern.permute.xlu0 0
    %306 = vperm.xlu0 %305, %v265
    %v307 = vpop.permute.xlu0 %306
    %310 = vset.pattern.permute.xlu0 0
    %311 = vperm.xlu0 %310, %v266
    %v312 = vpop.permute.xlu0 %311
    %315 = vset.pattern.permute.xlu0 0
    %316 = vperm.xlu0 %315, %v267
    %v317 = vpop.permute.xlu0 %316
    %320 = vset.pattern.permute.xlu0 0
    %321 = vperm.xlu0 %320, %v268
    %v322 = vpop.permute.xlu0 %321
    %v324 = vmul.f32 %v300, %v307
    %v325 = vmul.f32 %v301, %v312
    %v326 = vmul.f32 %v302, %v317
    %v327 = vmul.f32 %v303, %v322
    %v328 = vsub.f32 %v269, %v273
    %v329 = vsub.f32 %v270, %v274
    %v330 = vsub.f32 %v271, %v275
    %v331 = vsub.f32 %v272, %v276
    %v332 = vmul.f32 %v324, %v328
    %v333 = vmul.f32 %v325, %v329
    %v334 = vmul.f32 %v326, %v330
    %v335 = vmul.f32 %v327, %v331
    %v336 = vand.u32 2147483647, %v332
    %v337 = vand.u32 2147483647, %v333
    %v338 = vand.u32 2147483647, %v334
    %v339 = vand.u32 2147483647, %v335
    %vm340 = vcmp.lt.f32.partialorder %v336, 1.0
    %vm341 = vcmp.lt.f32.partialorder %v337, 1.0
    %vm342 = vcmp.lt.f32.partialorder %v338, 1.0
    %vm343 = vcmp.lt.f32.partialorder %v339, 1.0
    %v344 = vsel %vm340, 1, 0
    %v345 = vsel %vm341, 1, 0
    %v346 = vsel %vm342, 1, 0
    %v347 = vsel %vm343, 1, 0
    %v348 = vcvt.s32.f32 %v344
    %v349 = vcvt.s32.f32 %v345
    %v350 = vcvt.s32.f32 %v346
    %v351 = vcvt.s32.f32 %v347
    %v352 = vmul.f32 %v348, 0.5
    %v353 = vmul.f32 %v349, 0.5
    %v354 = vmul.f32 %v350, 0.5
    %v355 = vmul.f32 %v351, 0.5
    %v356 = vmul.f32 %v352, %v332
    %v357 = vmul.f32 %v353, %v333
    %v358 = vmul.f32 %v354, %v334
    %v359 = vmul.f32 %v355, %v335
    %v360 = vmul.f32 %v356, %v332
    %v361 = vmul.f32 %v357, %v333
    %v362 = vmul.f32 %v358, %v334
    %v363 = vmul.f32 %v359, %v335
    %v364 = vsub.f32 1.0, %v348
    %v365 = vsub.f32 1.0, %v349
    %v366 = vsub.f32 1.0, %v350
    %v367 = vsub.f32 1.0, %v351
    %v368 = vsub.f32 %v336, 0.5
    %v369 = vsub.f32 %v337, 0.5
    %v370 = vsub.f32 %v338, 0.5
    %v371 = vsub.f32 %v339, 0.5
    %v372 = vmul.f32 %v364, %v368
    %v373 = vmul.f32 %v365, %v369
    %v374 = vmul.f32 %v366, %v370
    %v375 = vmul.f32 %v367, %v371
    %v376 = vadd.f32 %v360, %v372
    %v377 = vadd.f32 %v361, %v373
    %v378 = vadd.f32 %v362, %v374
    %v379 = vadd.f32 %v363, %v375
    %v380 = vadd.f32 %v376, %v377
    %v381 = vadd.f32 %v380, %v378
    %v382 = vadd.f32 %v381, %v379
    %383 = vadd.xlane.f32.xlu0 %v382
    %v384 = vpop.xlane.xlu0 %383
    %v385 = vrot.slane %v384, 4
    %v386 = vadd.f32 %v384, %v385
    %v387 = vrot.slane %v386, 2
    %v388 = vadd.f32 %v386, %v387
    %v389 = vrot.slane %v388, 1
    %v390 = vadd.f32 %v388, %v389
    %s391 = vtos %v390
    %s392 = smul.f32 %s391, %s252
    %v393 = vld [vmem:[#allocation13] sm:$0xff]
    %v394 = vld [vmem:[#allocation13 + $0x8] sm:$0xff]
    %v395 = vld [vmem:[#allocation13 + $0x10] sm:$0x1f]
    %vm396 = vcmask 1044480
    %v397 = vsel %vm396, %v395, -inf
    %v398 = vmax.f32 %v393, %v394
    %v399 = vmax.f32 %v398, %v397
    %v400 = vrot.slane %v399, 4
    %v401 = vmax.f32 %v399, %v400
    %v402 = vrot.slane %v401, 2
    %v403 = vmax.f32 %v401, %v402
    %v404 = vrot.slane %v403, 1
    %v405 = vmax.f32 %v403, %v404
    %v406 = vsub.f32 %v393, %v405
    %v407 = vsub.f32 %v394, %v405
    %v408 = vsub.f32 %v395, %v405
    %v409 = vmul.f32 %v406, 1.442695
    %v410 = vpow.pop %v409
    %v411 = vmul.f32 %v407, 1.442695
    %v412 = vpow.pop %v411
    %v413 = vmul.f32 %v408, 1.442695
    %v414 = vpow.pop %v413
    %v415 = vadd.f32 %v410, %v412
    %v416 = vsel %vm396, %v414, 0.0
    %v417 = vadd.f32 %v415, %v416
    %v418 = vrot.slane %v417, 4
    %v419 = vadd.f32 %v417, %v418
    %v420 = vrot.slane %v419, 2
    %v421 = vadd.f32 %v419, %v420
    %v422 = vrot.slane %v421, 1
    %v423 = vadd.f32 %v421, %v422
    %v424 = vlog2.pop %v423
    %v425 = vmul.f32 %v424, 0.6931472
    %v426 = vadd.f32 %v405, %v425
    %v427 = vlaneseq
    %v428 = vshrl.u32 %v427, 7
    %v429 = vadd.s32 %v428, 8
    %v430 = vadd.s32 %v428, 16
    %v431 = vperm.slane %v222, 0
    %vm432 = vcmp.eq.s32.totalorder %v428, %v431
    %vm433 = vcmp.eq.s32.totalorder %v429, %v431
    %vm434 = vcmp.eq.s32.totalorder %v430, %v431
    %v435 = vsel %vm432, 1, 0
    %v436 = vsel %vm433, 1, 0
    %v437 = vsel %vm434, 1, 0
    %v438 = vcvt.s32.f32 %v435
    %v439 = vcvt.s32.f32 %v436
    %v440 = vcvt.s32.f32 %v437
    %v441 = vmul.f32 %v438, %v393
    %v442 = vmul.f32 %v439, %v394
    %v443 = vmul.f32 %v440, %v395
    %v444 = vadd.f32 %v441, %v442
    %v445 = vsel %vm396, %v443, 0.0
    %v446 = vadd.f32 %v444, %v445
    %v447 = vrot.slane %v446, 4
    %v448 = vadd.f32 %v446, %v447
    %v449 = vrot.slane %v448, 2
    %v450 = vadd.f32 %v448, %v449
    %v451 = vrot.slane %v450, 1
    %v452 = vadd.f32 %v450, %v451
    %v453 = vsub.f32 %v426, %v452
    %v454 = vmul.f32 %v453, %v225
    %v455 = vsel %vm226, %v454, 0.0
    %456 = vadd.xlane.f32.xlu0 %v455
    %v457 = vpop.xlane.xlu0 %456
    %v458 = vrot.slane %v457, 4
    %v459 = vadd.f32 %v457, %v458
    %v460 = vrot.slane %v459, 2
    %v461 = vadd.f32 %v459, %v460
    %v462 = vrot.slane %v461, 1
    %v463 = vadd.f32 %v461, %v462
    %s464 = vtos %v463
    %s465 = smul.f32 %s464, %s252
    %s466 = sadd.f32 %s193, %s221
    %s467 = sadd.f32 %s466, %s392
    %s468 = sadd.f32 %s467, %s465
    %s469 = scalar_lea.smem [#allocation14], 0
    %470 = sst [smem:[%s469]] %s193
    %s471 = scalar_lea.smem [#allocation14], 1
    %472 = sst [smem:[%s471]] %s221
    %s473 = scalar_lea.smem [#allocation14], 2
    %474 = sst [smem:[%s473]] %s392
    %s475 = scalar_lea.smem [#allocation14], 3
    %476 = sst [smem:[%s475]] %s465
    %s477 = scalar_lea.smem [#allocation14], 4
    %478 = sst [smem:[%s477]] %s468
    // Predicated region
    $region70: #{tpu_custom_call.1} parent=1 // pred_check
      _
    $region71: #{tpu_custom_call.1} parent=1 // pred_check_branch
      %480 = sbr.rel (0) target = $region73
    $region72: #{tpu_custom_call.1} parent=1 // pred_region
      %482 = vsyncadd [#allocation4], 0
      %s484 = sshll.u32 %s10, 4
      %s485 = int_to_ptr.hbm [resolvable:$true] %s484
      %487 = dma.smem_to_hbm [#allocation14], 16, %s485, [#allocation4]
    $region73: #{tpu_custom_call.1} parent=1 // pred_fallthru
      _
    // Predicated region
    $region74: #{tpu_custom_call.1} parent=1 // pred_check
      _
    $region75: #{tpu_custom_call.1} parent=1 // pred_check_branch
      %489 = sbr.rel (0) target = $region77
    $region76: #{tpu_custom_call.1} parent=1 // pred_region
      %491 = dma.done [#allocation4], 16
    $region77: #{tpu_custom_call.1} parent=1 // pred_fallthru
      _
    %492 = sfence
    %493 = vsyncpa [#allocation3], 1
    %494 = vsyncpa [#allocation6], 1
    %495 = vsyncpa [#allocation9], 1
    %496 = vsyncpa [#allocation12], 1
    %497 = vsyncpa [#allocation4], 1

</llo_original>
